<compile_context>
chip_gen: v6e
topology: v6e:2x2x1
jax: 0.10.0
libtpu: 0.0.40
codegen_flags: <defaults>
</compile_context>

<pallas_src>
import jax
import jax.numpy as jnp
from jax.experimental import pallas as pl
from jax.experimental.pallas import tpu as pltpu


def _round_up(n, m):
    return ((n + m - 1) // m) * m


def _generator_kernel(x_ref, noise_ref,
                      w1_ref, b1_ref,
                      w2_ref, b2_ref,
                      ws_ref, bs_ref,
                      prelu_ref,
                      out_ref):
    """One batch tile of the full Generator forward pass.

    Matmuls run in the weights' dtype (bf16 by default) with f32 MXU
    accumulation; elementwise math (PReLU, softplus, reparam) stays in f32.
    """
    a1 = prelu_ref[0]            # PReLU slope 1 (SMEM scalar)
    a2 = prelu_ref[1]            # PReLU slope 2 (SMEM scalar)

    x = x_ref[...]

    # ---- emb_net_cv: Linear -> PReLU -> Linear -> PReLU -------------------
    h = jnp.dot(x, w1_ref[...], preferred_element_type=jnp.float32) + b1_ref[...]
    h = jnp.where(h >= 0, h, a1 * h)

    h2 = jnp.dot(h.astype(w2_ref.dtype), w2_ref[...],
                 preferred_element_type=jnp.float32) + b2_ref[...]
    hc = jnp.where(h2 >= 0, h2, a2 * h2)

    # ---- fc_std: Linear -> Softplus ----------------------------------------
    s = jnp.dot(hc.astype(ws_ref.dtype), ws_ref[...],
                preferred_element_type=jnp.float32) + bs_ref[...]
    hc_std = jnp.logaddexp(s, 0.0)                  # stable softplus

    # ---- reparameterization -------------------------------------------------
    out_ref[...] = (hc + noise_ref[...] * hc_std).astype(out_ref.dtype)


def generator_forward(x, noise, params, *, tm=256, compute_dtype=jnp.bfloat16):
    """x: (B, din) f32, noise: (B, dout) f32 standard normal."""
    B, din = x.shape
    dout = params["b1"].shape[-1]
    assert noise.shape == (B, dout)

    # Lane-align features to 128; sublane-align / tile the batch.
    din_p = _round_up(din, 128)
    dout_p = _round_up(dout, 128)
    tm_eff = max(8, min(_round_up(tm, 8), _round_up(B, 8)))
    Bp = _round_up(B, tm_eff)
    grid = (Bp // tm_eff,)

    pad2 = lambda a, r, c: jnp.pad(a, ((0, r - a.shape[0]), (0, c - a.shape[1])))

    x_p = pad2(x, Bp, din_p).astype(compute_dtype)
    noise_p = pad2(noise, Bp, dout_p).astype(jnp.float32)

    w1 = pad2(params["w1"], din_p, dout_p).astype(compute_dtype)
    w2 = pad2(params["w2"], dout_p, dout_p).astype(compute_dtype)
    ws = pad2(params["ws"], dout_p, dout_p).astype(compute_dtype)
    b1 = pad2(params["b1"], 1, dout_p).astype(jnp.float32)
    b2 = pad2(params["b2"], 1, dout_p).astype(jnp.float32)
    bs = pad2(params["bs"], 1, dout_p).astype(jnp.float32)
    prelu = jnp.stack([params["a1"].reshape(()),
                       params["a2"].reshape(())]).astype(jnp.float32)

    row_in = pl.BlockSpec((tm_eff, din_p), lambda i: (i, 0))
    row_out = pl.BlockSpec((tm_eff, dout_p), lambda i: (i, 0))
    full = lambda shape: pl.BlockSpec(shape, lambda i: (0,) * len(shape))
    smem = pl.BlockSpec(memory_space=pltpu.MemorySpace.SMEM)

    out = pl.pallas_call(
        _generator_kernel,
        out_shape=jax.ShapeDtypeStruct((Bp, dout_p), jnp.float32),
        grid_spec=pltpu.PrefetchScalarGridSpec(
            num_scalar_prefetch=0,
            grid=grid,
            in_specs=[
                row_in,                       # x tile
                row_out,                      # noise tile
                full((din_p, dout_p)),        # w1 (pre-transposed, padded)
                full((1, dout_p)),            # b1
                full((dout_p, dout_p)),       # w2
                full((1, dout_p)),            # b2
                full((dout_p, dout_p)),       # w_std
                full((1, dout_p)),            # b_std
                smem,                         # [a1, a2] PReLU slopes
            ],
            out_specs=row_out,
        ),
        compiler_params=pltpu.CompilerParams(
            dimension_semantics=("parallel",),
            vmem_limit_bytes=64 * 1024 * 1024),
    )(x_p, noise_p, w1, b1, w2, b2, ws, bs, prelu)

    return out[:B, :dout]


def init_params(key, dim_composition_vec, dim_out):
    """Deterministic synthetic init (shapes follow the PyTorch module)."""
    ks = jax.random.split(key, 6)
    scale1 = 1.0 / jnp.sqrt(dim_composition_vec)
    scale2 = 1.0 / jnp.sqrt(dim_out)
    # weights stored pre-transposed: (in, out), so kernel computes x @ W_T + b
    return {
        "w1": jax.random.uniform(ks[0], (dim_composition_vec, dim_out),
                                 jnp.float32, -scale1, scale1),
        "b1": jax.random.uniform(ks[1], (1, dim_out), jnp.float32, -scale1, scale1),
        "a1": jnp.full((1, 1), 0.25, jnp.float32),     # PReLU default init
        "w2": jax.random.uniform(ks[2], (dim_out, dim_out),
                                 jnp.float32, -scale2, scale2),
        "b2": jax.random.uniform(ks[3], (1, dim_out), jnp.float32, -scale2, scale2),
        "a2": jnp.full((1, 1), 0.25, jnp.float32),     # PReLU default init
        "ws": jax.random.uniform(ks[4], (dim_out, dim_out),
                                 jnp.float32, -scale2, scale2),
        "bs": jax.random.uniform(ks[5], (1, dim_out), jnp.float32, -scale2, scale2),
    }


def _reference_forward(x, noise, p, compute_dtype=jnp.bfloat16):
    """Pure-JAX reference mirroring the kernel's precision policy
    (bf16 matmul inputs, f32 accumulation, f32 elementwise), same noise."""
    cd = compute_dtype
    mm = lambda a, w: jnp.dot(a.astype(cd), w.astype(cd),
                              preferred_element_type=jnp.float32)
    prelu = lambda v, a: jnp.where(v >= 0, v, a * v)
    h = prelu(mm(x, p["w1"]) + p["b1"], p["a1"][0, 0])
    hc = prelu(mm(h, p["w2"]) + p["b2"], p["a2"][0, 0])
    hc_std = jnp.logaddexp(mm(hc, p["ws"]) + p["bs"], 0.0)
    return hc + noise * hc_std


if __name__ == "__main__":
    # Deliberately non-aligned small shapes to exercise the padding paths.
    B, dim_cv, dim_out = 10, 48, 40

    key = jax.random.PRNGKey(0)
    k_param, k_x, k_noise = jax.random.split(key, 3)

    params = init_params(k_param, dim_cv, dim_out)
    x = jax.random.normal(k_x, (B, dim_cv), jnp.float32)
    # randn_like(hc_std): standard-normal noise with the output shape,
    # generated outside the kernel so Pallas and reference share it.
    noise = jax.random.normal(k_noise, (B, dim_out), jnp.float32)

    out = generator_forward(x, noise, params)
    jax.block_until_ready(out)

    ref = _reference_forward(x, noise, params)
    assert out.shape == (B, dim_out)
    assert jnp.allclose(out, ref, atol=1e-3, rtol=1e-3), "mismatch vs reference"

    print("KERNEL_OK")
</pallas_src>

<mosaic_0001>
module attributes {stable_mosaic.version = 11 : i64} {
  func.func @_generator_kernel(%arg0: i32, %arg1: memref<16x128xbf16, #tpu.memory_space<vmem>>, %arg2: memref<16x128xf32, #tpu.memory_space<vmem>>, %arg3: memref<128x128xbf16, #tpu.memory_space<vmem>>, %arg4: memref<1x128xf32, #tpu.memory_space<vmem>>, %arg5: memref<128x128xbf16, #tpu.memory_space<vmem>>, %arg6: memref<1x128xf32, #tpu.memory_space<vmem>>, %arg7: memref<128x128xbf16, #tpu.memory_space<vmem>>, %arg8: memref<1x128xf32, #tpu.memory_space<vmem>>, %arg9: memref<2xf32, #tpu.memory_space<smem>>, %arg10: memref<16x128xf32, #tpu.memory_space<vmem>>) attributes {dimension_semantics = [#tpu.dimension_semantics<parallel>], iteration_bounds = array<i64: 1>, scalar_prefetch = 0 : i64, scratch_operands = 0 : i64, tpu.core_type = #tpu.core_type<tc>, window_params = [{transform_indices = @transform_0, window_bounds = array<i64: 16, 128>}, {transform_indices = @transform_1, window_bounds = array<i64: 16, 128>}, {pipeline_mode = #tpu.pipeline_mode<synchronous>, transform_indices = @transform_2, window_bounds = array<i64: 128, 128>}, {pipeline_mode = #tpu.pipeline_mode<synchronous>, transform_indices = @transform_3, window_bounds = array<i64: 1, 128>}, {pipeline_mode = #tpu.pipeline_mode<synchronous>, transform_indices = @transform_4, window_bounds = array<i64: 128, 128>}, {pipeline_mode = #tpu.pipeline_mode<synchronous>, transform_indices = @transform_5, window_bounds = array<i64: 1, 128>}, {pipeline_mode = #tpu.pipeline_mode<synchronous>, transform_indices = @transform_6, window_bounds = array<i64: 128, 128>}, {pipeline_mode = #tpu.pipeline_mode<synchronous>, transform_indices = @transform_7, window_bounds = array<i64: 1, 128>}, {transform_indices = @transform_8, window_bounds = array<i64: 2>}, {transform_indices = @transform_9, window_bounds = array<i64: 16, 128>}]} {
    %c0 = arith.constant 0 : index
    %0 = memref.load %arg9[%c0] : memref<2xf32, #tpu.memory_space<smem>>
    %c1 = arith.constant 1 : index
    %1 = memref.load %arg9[%c1] : memref<2xf32, #tpu.memory_space<smem>>
    %c0_0 = arith.constant 0 : index
    %c0_1 = arith.constant 0 : index
    %2 = vector.load %arg1[%c0_0, %c0_1] : memref<16x128xbf16, #tpu.memory_space<vmem>>, vector<16x128xbf16>
    %c0_2 = arith.constant 0 : index
    %c0_3 = arith.constant 0 : index
    %3 = vector.load %arg3[%c0_2, %c0_3] : memref<128x128xbf16, #tpu.memory_space<vmem>>, vector<128x128xbf16>
    %cst = arith.constant dense<0.000000e+00> : vector<16x128xf32>
    %4 = tpu.matmul %2, %3, %cst {dimension_numbers = #tpu.dot_dimension_numbers<[1], [0], [0], [1], [0, 0, 1, 1], [], []>} : vector<16x128xbf16>, vector<128x128xbf16>, vector<16x128xf32> -> vector<16x128xf32>
    %c0_4 = arith.constant 0 : index
    %c0_5 = arith.constant 0 : index
    %5 = vector.load %arg4[%c0_4, %c0_5] : memref<1x128xf32, #tpu.memory_space<vmem>>, vector<1x128xf32>
    %6 = vector.broadcast %5 : vector<1x128xf32> to vector<16x128xf32>
    %7 = arith.addf %4, %6 : vector<16x128xf32>
    %cst_6 = arith.constant 0.000000e+00 : f32
    %8 = vector.broadcast %cst_6 : f32 to vector<16x128xf32>
    %9 = arith.cmpf oge, %7, %8 : vector<16x128xf32>
    %10 = vector.broadcast %0 : f32 to vector<16x128xf32>
    %11 = arith.mulf %10, %7 : vector<16x128xf32>
    %12 = arith.select %9, %7, %11 : vector<16x128xi1>, vector<16x128xf32>
    %13 = arith.truncf %12 : vector<16x128xf32> to vector<16x128xbf16>
    %c0_7 = arith.constant 0 : index
    %c0_8 = arith.constant 0 : index
    %14 = vector.load %arg5[%c0_7, %c0_8] : memref<128x128xbf16, #tpu.memory_space<vmem>>, vector<128x128xbf16>
    %cst_9 = arith.constant dense<0.000000e+00> : vector<16x128xf32>
    %15 = tpu.matmul %13, %14, %cst_9 {dimension_numbers = #tpu.dot_dimension_numbers<[1], [0], [0], [1], [0, 0, 1, 1], [], []>} : vector<16x128xbf16>, vector<128x128xbf16>, vector<16x128xf32> -> vector<16x128xf32>
    %c0_10 = arith.constant 0 : index
    %c0_11 = arith.constant 0 : index
    %16 = vector.load %arg6[%c0_10, %c0_11] : memref<1x128xf32, #tpu.memory_space<vmem>>, vector<1x128xf32>
    %17 = vector.broadcast %16 : vector<1x128xf32> to vector<16x128xf32>
    %18 = arith.addf %15, %17 : vector<16x128xf32>
    %cst_12 = arith.constant 0.000000e+00 : f32
    %19 = vector.broadcast %cst_12 : f32 to vector<16x128xf32>
    %20 = arith.cmpf oge, %18, %19 : vector<16x128xf32>
    %21 = vector.broadcast %1 : f32 to vector<16x128xf32>
    %22 = arith.mulf %21, %18 : vector<16x128xf32>
    %23 = arith.select %20, %18, %22 : vector<16x128xi1>, vector<16x128xf32>
    %24 = arith.truncf %23 : vector<16x128xf32> to vector<16x128xbf16>
    %c0_13 = arith.constant 0 : index
    %c0_14 = arith.constant 0 : index
    %25 = vector.load %arg7[%c0_13, %c0_14] : memref<128x128xbf16, #tpu.memory_space<vmem>>, vector<128x128xbf16>
    %cst_15 = arith.constant dense<0.000000e+00> : vector<16x128xf32>
    %26 = tpu.matmul %24, %25, %cst_15 {dimension_numbers = #tpu.dot_dimension_numbers<[1], [0], [0], [1], [0, 0, 1, 1], [], []>} : vector<16x128xbf16>, vector<128x128xbf16>, vector<16x128xf32> -> vector<16x128xf32>
    %c0_16 = arith.constant 0 : index
    %c0_17 = arith.constant 0 : index
    %27 = vector.load %arg8[%c0_16, %c0_17] : memref<1x128xf32, #tpu.memory_space<vmem>>, vector<1x128xf32>
    %28 = vector.broadcast %27 : vector<1x128xf32> to vector<16x128xf32>
    %29 = arith.addf %26, %28 : vector<16x128xf32>
    %cst_18 = arith.constant 0.000000e+00 : f32
    %30 = vector.broadcast %cst_18 : f32 to vector<16x128xf32>
    %31 = arith.maximumf %29, %30 : vector<16x128xf32>
    %32 = vector.broadcast %cst_18 : f32 to vector<16x128xf32>
    %33 = arith.subf %29, %32 : vector<16x128xf32>
    %34 = arith.cmpf one, %33, %33 : vector<16x128xf32>
    %35 = vector.broadcast %cst_18 : f32 to vector<16x128xf32>
    %36 = arith.addf %29, %35 : vector<16x128xf32>
    %37 = math.absf %33 : vector<16x128xf32>
    %cst_19 = arith.constant 0.000000e+00 : f32
    %38 = vector.broadcast %cst_19 : f32 to vector<16x128xf32>
    %39 = arith.subf %38, %37 : vector<16x128xf32>
    %40 = math.exp %39 : vector<16x128xf32>
    %41 = math.log1p %40 : vector<16x128xf32>
    %42 = arith.addf %31, %41 : vector<16x128xf32>
    %43 = arith.select %34, %36, %42 : vector<16x128xi1>, vector<16x128xf32>
    %c0_20 = arith.constant 0 : index
    %c0_21 = arith.constant 0 : index
    %44 = vector.load %arg2[%c0_20, %c0_21] : memref<16x128xf32, #tpu.memory_space<vmem>>, vector<16x128xf32>
    %45 = arith.mulf %44, %43 : vector<16x128xf32>
    %46 = arith.addf %23, %45 : vector<16x128xf32>
    %c0_22 = arith.constant 0 : index
    %c0_23 = arith.constant 0 : index
    %47 = vector.load %arg10[%c0_22, %c0_23] : memref<16x128xf32, #tpu.memory_space<vmem>>, vector<16x128xf32>
    tpu.vector_store %arg10[%c0_22, %c0_23], %46 {strides = array<i32>} : memref<16x128xf32, #tpu.memory_space<vmem>>, vector<16x128xf32>,
    return
  }
  func.func @transform_0(%arg0: i32) -> (i32, i32) {
    %c0_i32 = arith.constant 0 : i32
    %c0_i32_0 = arith.constant 0 : i32
    return %arg0, %c0_i32 : i32, i32
  }
  func.func @transform_1(%arg0: i32) -> (i32, i32) {
    %c0_i32 = arith.constant 0 : i32
    %c0_i32_0 = arith.constant 0 : i32
    return %arg0, %c0_i32 : i32, i32
  }
  func.func @transform_2(%arg0: i32) -> (i32, i32) {
    %c0_i32 = arith.constant 0 : i32
    %c0_i32_0 = arith.constant 0 : i32
    %c0_i32_1 = arith.constant 0 : i32
    return %c0_i32, %c0_i32_0 : i32, i32
  }
  func.func @transform_3(%arg0: i32) -> (i32, i32) {
    %c0_i32 = arith.constant 0 : i32
    %c0_i32_0 = arith.constant 0 : i32
    %c0_i32_1 = arith.constant 0 : i32
    return %c0_i32, %c0_i32_0 : i32, i32
  }
  func.func @transform_4(%arg0: i32) -> (i32, i32) {
    %c0_i32 = arith.constant 0 : i32
    %c0_i32_0 = arith.constant 0 : i32
    %c0_i32_1 = arith.constant 0 : i32
    return %c0_i32, %c0_i32_0 : i32, i32
  }
  func.func @transform_5(%arg0: i32) -> (i32, i32) {
    %c0_i32 = arith.constant 0 : i32
    %c0_i32_0 = arith.constant 0 : i32
    %c0_i32_1 = arith.constant 0 : i32
    return %c0_i32, %c0_i32_0 : i32, i32
  }
  func.func @transform_6(%arg0: i32) -> (i32, i32) {
    %c0_i32 = arith.constant 0 : i32
    %c0_i32_0 = arith.constant 0 : i32
    %c0_i32_1 = arith.constant 0 : i32
    return %c0_i32, %c0_i32_0 : i32, i32
  }
  func.func @transform_7(%arg0: i32) -> (i32, i32) {
    %c0_i32 = arith.constant 0 : i32
    %c0_i32_0 = arith.constant 0 : i32
    %c0_i32_1 = arith.constant 0 : i32
    return %c0_i32, %c0_i32_0 : i32, i32
  }
  func.func @transform_8(%arg0: i32) -> i32 {
    %c0_i32 = arith.constant 0 : i32
    %c0_i32_0 = arith.constant 0 : i32
    return %c0_i32 : i32
  }
  func.func @transform_9(%arg0: i32) -> (i32, i32) {
    %c0_i32 = arith.constant 0 : i32
    %c0_i32_0 = arith.constant 0 : i32
    return %arg0, %c0_i32 : i32, i32
  }
}

</mosaic_0001>

<llo_original>
// kernel: tpu_custom_call.1
$region0: #{tpu_custom_call.1}
  #allocation0 [shape = 'u32[]', space=smem, size = 0x4, offset = 0x4, fixed_abs, tag = 'smem constant byte address 0x4 - core index']
  #allocation1 [shape = 'u32[144,128]{1,0:T(1,128)}', space=vmem, size = 0x12000, scoped, tag = 'internal scratch']
  %s0 = inlined_call_operand.hbm [shape: bf16[16,128], index: 0, kind: input, shape index: {}]
  %s1 = inlined_call_operand.hbm [shape: f32[16,128], index: 1, kind: input, shape index: {}]
  %s2 = inlined_call_operand.hbm [shape: bf16[128,128], index: 2, kind: input, shape index: {}]
  %s3 = inlined_call_operand.vmem [shape: f32[1,128], index: 3, kind: input, shape index: {}]
  %s4 = inlined_call_operand.hbm [shape: bf16[128,128], index: 4, kind: input, shape index: {}]
  %s5 = inlined_call_operand.vmem [shape: f32[1,128], index: 5, kind: input, shape index: {}]
  %s6 = inlined_call_operand.hbm [shape: bf16[128,128], index: 6, kind: input, shape index: {}]
  %s7 = inlined_call_operand.vmem [shape: f32[1,128], index: 7, kind: input, shape index: {}]
  %s8 = inlined_call_operand.vmem [shape: f32[2], index: 8, kind: input, shape index: {}]
  %s9 = inlined_call_operand.hbm [shape: f32[16,128], index: 9, kind: output, shape index: {}]
  %s10 = sld [smem:[#allocation0]]
  $region70: #{tpu_custom_call.1} parent=0
    _
  %s12 = ssub.s32 1, %s10
  %s13 = scalar_select 0, %s12, %s10
  $region1: #{tpu_custom_call.1} parent=0
    #allocation2 [shape = 'u8[4096]{0}', space=vmem, size = 0x1000, scoped, tag = 'input window, operand 0, single buffered']
    #allocation3 [shape = 's32[1]{0}', space=sflag, size = 0x4, scoped, tag = 'scoped memory for tpu_custom_call.1']
    #allocation4 [shape = 's32[1]{0}', space=sflag, size = 0x4, scoped, tag = 'scoped memory for tpu_custom_call.1']
    #allocation5 [shape = 's32[1]{0}', space=sflag, size = 0x4, scoped, tag = 'scoped memory for tpu_custom_call.1']
    #allocation6 [shape = 'u8[8192]{0}', space=vmem, size = 0x2000, scoped, tag = 'input window, operand 1, single buffered']
    #allocation7 [shape = 's32[1]{0}', space=sflag, size = 0x4, scoped, tag = 'scoped memory for tpu_custom_call.1']
    #allocation8 [shape = 'u8[32768]{0}', space=vmem, size = 0x8000, scoped, tag = 'input window, operand 2, single buffered']
    #allocation9 [shape = 'u8[32768]{0}', space=vmem, size = 0x8000, scoped, tag = 'input window, operand 4, single buffered']
    #allocation10 [shape = 's32[1]{0}', space=sflag, size = 0x4, scoped, tag = 'scoped memory for tpu_custom_call.1']
    #allocation11 [shape = 'u8[32768]{0}', space=vmem, size = 0x8000, scoped, tag = 'input window, operand 6, single buffered']
    #allocation12 [shape = 'u8[512]{0}', space=smem, size = 0x200, scoped, tag = 'input window, operand 8, single buffered']
    #allocation13 [shape = 'u8[8192]{0}', space=vmem, size = 0x2000, scoped, tag = 'output window, operand 0, single buffered']
    %14 = vsyncpa [#allocation3], 0
    %15 = vsyncpa [#allocation7], 0
    %16 = vsyncpa [#allocation10], 0
    %17 = vsyncpa [#allocation5], 0
    %18 = vsyncpa [#allocation4], 0
    // Predicated region
    $region2: #{tpu_custom_call.1} parent=1 // pred_check
      _
    $region3: #{tpu_custom_call.1} parent=1 // pred_check_branch
      %20 = sbr.rel (0) target = $region5
    $region4: #{tpu_custom_call.1} parent=1 // pred_region
      %s22 = ssub.s32 128, 128
      %23 = vsyncadd [#allocation3], %s22
      %s24 = sshll.u32 [#allocation2], 4
      %s25 = int_to_ptr.vmem [resolvable:$true] %s24
      %30 = dma.hbm_to_vmem [thread:$0]  %s0, 128, %s25, [#allocation3], 64, 64, 4
    $region5: #{tpu_custom_call.1} parent=1 // pred_fallthru
      _
    // Predicated region
    $region6: #{tpu_custom_call.1} parent=1 // pred_check
      _
    $region7: #{tpu_custom_call.1} parent=1 // pred_check_branch
      %32 = sbr.rel (0) target = $region9
    $region8: #{tpu_custom_call.1} parent=1 // pred_region
      %s34 = ssub.s32 256, 256
      %35 = vsyncadd [#allocation7], %s34
      %s36 = sshll.u32 [#allocation6], 4
      %s37 = int_to_ptr.vmem [resolvable:$true] %s36
      %42 = dma.hbm_to_vmem [thread:$0]  %s1, 256, %s37, [#allocation7], 128, 128, 8
    $region9: #{tpu_custom_call.1} parent=1 // pred_fallthru
      _
    // Predicated region
    $region10: #{tpu_custom_call.1} parent=1 // pred_check
      _
    $region11: #{tpu_custom_call.1} parent=1 // pred_check_branch
      %44 = sbr.rel (0) target = $region13
    $region12: #{tpu_custom_call.1} parent=1 // pred_region
      %s46 = ssub.s32 1024, 1024
      %47 = vsyncadd [#allocation7], %s46
      %s48 = sshll.u32 [#allocation8], 4
      %s49 = int_to_ptr.vmem [resolvable:$true] %s48
      %54 = dma.hbm_to_vmem [thread:$0]  %s2, 1024, %s49, [#allocation7], 64, 64, 4
    $region13: #{tpu_custom_call.1} parent=1 // pred_fallthru
      _
    // Predicated region
    $region14: #{tpu_custom_call.1} parent=1 // pred_check
      _
    $region15: #{tpu_custom_call.1} parent=1 // pred_check_branch
      %56 = sbr.rel (0) target = $region17
    $region16: #{tpu_custom_call.1} parent=1 // pred_region
      _
    $region17: #{tpu_custom_call.1} parent=1 // pred_fallthru
      _
    // Predicated region
    $region18: #{tpu_custom_call.1} parent=1 // pred_check
      _
    $region19: #{tpu_custom_call.1} parent=1 // pred_check_branch
      %58 = sbr.rel (0) target = $region21
    $region20: #{tpu_custom_call.1} parent=1 // pred_region
      %s60 = ssub.s32 1024, 1024
      %61 = vsyncadd [#allocation10], %s60
      %s62 = sshll.u32 [#allocation9], 4
      %s63 = int_to_ptr.vmem [resolvable:$true] %s62
      %68 = dma.hbm_to_vmem [thread:$0]  %s4, 1024, %s63, [#allocation10], 64, 64, 4
    $region21: #{tpu_custom_call.1} parent=1 // pred_fallthru
      _
    // Predicated region
    $region22: #{tpu_custom_call.1} parent=1 // pred_check
      _
    $region23: #{tpu_custom_call.1} parent=1 // pred_check_branch
      %70 = sbr.rel (0) target = $region25
    $region24: #{tpu_custom_call.1} parent=1 // pred_region
      _
    $region25: #{tpu_custom_call.1} parent=1 // pred_fallthru
      _
    // Predicated region
    $region26: #{tpu_custom_call.1} parent=1 // pred_check
      _
    $region27: #{tpu_custom_call.1} parent=1 // pred_check_branch
      %72 = sbr.rel (0) target = $region29
    $region28: #{tpu_custom_call.1} parent=1 // pred_region
      %s74 = ssub.s32 1024, 1024
      %75 = vsyncadd [#allocation10], %s74
      %s76 = sshll.u32 [#allocation11], 4
      %s77 = int_to_ptr.vmem [resolvable:$true] %s76
      %82 = dma.hbm_to_vmem [thread:$0]  %s6, 1024, %s77, [#allocation10], 64, 64, 4
    $region29: #{tpu_custom_call.1} parent=1 // pred_fallthru
      _
    // Predicated region
    $region30: #{tpu_custom_call.1} parent=1 // pred_check
      _
    $region31: #{tpu_custom_call.1} parent=1 // pred_check_branch
      %84 = sbr.rel (0) target = $region33
    $region32: #{tpu_custom_call.1} parent=1 // pred_region
      _
    $region33: #{tpu_custom_call.1} parent=1 // pred_fallthru
      _
    // Predicated region
    $region34: #{tpu_custom_call.1} parent=1 // pred_check
      _
    $region35: #{tpu_custom_call.1} parent=1 // pred_check_branch
      %86 = sbr.rel (0) target = $region37
    $region36: #{tpu_custom_call.1} parent=1 // pred_region
      %s88 = ssub.s32 16, 16
      %89 = vsyncadd [#allocation5], %s88
      %s91 = sshll.u32 %s8, 4
      %s92 = int_to_ptr.vmem [resolvable:$true] %s91
      %94 = dma.vmem_to_smem %s92, 16, [#allocation12], [#allocation5]
    $region37: #{tpu_custom_call.1} parent=1 // pred_fallthru
      _
    // Predicated region
    $region38: #{tpu_custom_call.1} parent=1 // pred_check
      _
    $region39: #{tpu_custom_call.1} parent=1 // pred_check_branch
      %96 = sbr.rel (0) target = $region41
    $region40: #{tpu_custom_call.1} parent=1 // pred_region
      %97 = dma.done [#allocation3], 128
    $region41: #{tpu_custom_call.1} parent=1 // pred_fallthru
      _
    // Predicated region
    $region42: #{tpu_custom_call.1} parent=1 // pred_check
      _
    $region43: #{tpu_custom_call.1} parent=1 // pred_check_branch
      %99 = sbr.rel (0) target = $region45
    $region44: #{tpu_custom_call.1} parent=1 // pred_region
      %100 = dma.done [#allocation7], 256
    $region45: #{tpu_custom_call.1} parent=1 // pred_fallthru
      _
    // Predicated region
    $region46: #{tpu_custom_call.1} parent=1 // pred_check
      _
    $region47: #{tpu_custom_call.1} parent=1 // pred_check_branch
      %102 = sbr.rel (0) target = $region49
    $region48: #{tpu_custom_call.1} parent=1 // pred_region
      %103 = dma.done [#allocation7], 1024
    $region49: #{tpu_custom_call.1} parent=1 // pred_fallthru
      _
    // Predicated region
    $region50: #{tpu_custom_call.1} parent=1 // pred_check
      _
    $region51: #{tpu_custom_call.1} parent=1 // pred_check_branch
      %105 = sbr.rel (0) target = $region53
    $region52: #{tpu_custom_call.1} parent=1 // pred_region
      %106 = dma.done [#allocation10], 1024
    $region53: #{tpu_custom_call.1} parent=1 // pred_fallthru
      _
    // Predicated region
    $region54: #{tpu_custom_call.1} parent=1 // pred_check
      _
    $region55: #{tpu_custom_call.1} parent=1 // pred_check_branch
      %108 = sbr.rel (0) target = $region57
    $region56: #{tpu_custom_call.1} parent=1 // pred_region
      %109 = dma.done [#allocation10], 1024
    $region57: #{tpu_custom_call.1} parent=1 // pred_fallthru
      _
    // Predicated region
    $region58: #{tpu_custom_call.1} parent=1 // pred_check
      _
    $region59: #{tpu_custom_call.1} parent=1 // pred_check_branch
      %111 = sbr.rel (0) target = $region61
    $region60: #{tpu_custom_call.1} parent=1 // pred_region
      %112 = dma.done [#allocation5], 16
    $region61: #{tpu_custom_call.1} parent=1 // pred_fallthru
      _
    %113 = sfence
    %s115 = sld [smem:[#allocation12]]
    %s116 = sld [smem:[#allocation12 + $0x1]]
    %v117 = vld [vmem:[#allocation2] sm:$0xf]
    %v118 = vld [vmem:[#allocation2 + $0x4] sm:$0xf]
    %v119 = vld [vmem:[#allocation8] sm:$0xf]
    %v120 = vld [vmem:[#allocation8 + $0x4] sm:$0xf]
    %v121 = vld [vmem:[#allocation8 + $0x8] sm:$0xf]
    %v122 = vld [vmem:[#allocation8 + $0xc] sm:$0xf]
    %v123 = vld [vmem:[#allocation8 + $0x10] sm:$0xf]
    %v124 = vld [vmem:[#allocation8 + $0x14] sm:$0xf]
    %v125 = vld [vmem:[#allocation8 + $0x18] sm:$0xf]
    %v126 = vld [vmem:[#allocation8 + $0x1c] sm:$0xf]
    %v127 = vld [vmem:[#allocation8 + $0x20] sm:$0xf]
    %v128 = vld [vmem:[#allocation8 + $0x24] sm:$0xf]
    %v129 = vld [vmem:[#allocation8 + $0x28] sm:$0xf]
    %v130 = vld [vmem:[#allocation8 + $0x2c] sm:$0xf]
    %v131 = vld [vmem:[#allocation8 + $0x30] sm:$0xf]
    %v132 = vld [vmem:[#allocation8 + $0x34] sm:$0xf]
    %v133 = vld [vmem:[#allocation8 + $0x38] sm:$0xf]
    %v134 = vld [vmem:[#allocation8 + $0x3c] sm:$0xf]
    %v135 = vld [vmem:[%s3] sm:$0x1]
    %v137 = vlaneseq
    %v138 = vshrl.u32 %v137, 7
    %v139 = vsub.s32 0, %v138
    %v140 = vrot.slane %v135, %v139
    %v144 = vunpack.c.l.b16 %v117
    %v145 = vunpack.c.l.b16 %v118
    %v146 = vpack.c.b16 %v145, %v144
    %v164 = vunpack.c.l.b16 %v119
    %v165 = vunpack.c.l.b16 %v120
    %v166 = vunpack.c.l.b16 %v121
    %v167 = vunpack.c.l.b16 %v122
    %v168 = vunpack.c.l.b16 %v123
    %v169 = vunpack.c.l.b16 %v124
    %v170 = vunpack.c.l.b16 %v125
    %v171 = vunpack.c.l.b16 %v126
    %v172 = vunpack.c.l.b16 %v127
    %v173 = vunpack.c.l.b16 %v128
    %v174 = vunpack.c.l.b16 %v129
    %v175 = vunpack.c.l.b16 %v130
    %v176 = vunpack.c.l.b16 %v131
    %v177 = vunpack.c.l.b16 %v132
    %v178 = vunpack.c.l.b16 %v133
    %v179 = vunpack.c.l.b16 %v134
    %v180 = vpack.c.b16 %v165, %v164
    %v181 = vpack.c.b16 %v167, %v166
    %v182 = vpack.c.b16 %v169, %v168
    %v183 = vpack.c.b16 %v171, %v170
    %v184 = vpack.c.b16 %v173, %v172
    %v185 = vpack.c.b16 %v175, %v174
    %v186 = vpack.c.b16 %v177, %v176
    %v187 = vpack.c.b16 %v179, %v178
    %196 = vmatprep.subr.bf16.mxu0 0
    %197 = vmatpush1.bf16.msra.mxu0 %v187
    %198 = vmatprep.subr.bf16.mxu0 0
    %199 = vmatpush1.bf16.msra.mxu0 %v186
    %200 = vmatprep.subr.bf16.mxu0 0
    %201 = vmatpush1.bf16.msra.mxu0 %v185
    %202 = vmatprep.subr.bf16.mxu0 0
    %203 = vmatpush1.bf16.msra.mxu0 %v184
    %204 = vmatprep.subr.bf16.mxu0 0
    %205 = vmatpush1.bf16.msra.mxu0 %v183
    %206 = vmatprep.subr.bf16.mxu0 0
    %207 = vmatpush1.bf16.msra.mxu0 %v182
    %208 = vmatprep.subr.bf16.mxu0 0
    %209 = vmatpush1.bf16.msra.mxu0 %v181
    %210 = vmatprep.subr.bf16.mxu0 0
    %211 = vmatpush1.bf16.msra.mxu0 %v180
    %212 = vmatprep.subr.bf16.mxu0 0
    %213 = vmatpush2.bf16.msra.mxu0 0
    %214 = vmatprep.subr.bf16.mxu0 0
    %215 = vmatpush2.bf16.msra.mxu0 0
    %216 = vmatprep.subr.bf16.mxu0 0
    %217 = vmatpush2.bf16.msra.mxu0 0
    %218 = vmatprep.subr.bf16.mxu0 0
    %219 = vmatpush2.bf16.msra.mxu0 0
    %220 = vmatprep.subr.bf16.mxu0 0
    %221 = vmatpush2.bf16.msra.mxu0 0
    %222 = vmatprep.subr.bf16.mxu0 0
    %223 = vmatpush2.bf16.msra.mxu0 0
    %224 = vmatprep.subr.bf16.mxu0 0
    %225 = vmatpush2.bf16.msra.mxu0 0
    %226 = vmatprep.subr.bf16.mxu0 0
    %227 = vmatpush2.bf16.msra.mxu0 0
    %228 = vmatprep.mubr.bf16.mxu0 0
    %229 = vmatmul.mubr.bf16.gmra.mxu0 %v146
    %v230 = vpop.f32.mrf.mxu0
    %v231 = vadd.f32 %v140, %v230
    %v232 = vpop.f32.mrf.mxu0
    %v233 = vpop.f32.mrf.mxu0
    %v234 = vadd.f32 %v140, %v233
    %v235 = vpop.f32.mrf.mxu0
    %236 = vdwg.mxu0
    %vm237 = vcmp.ge.f32.partialorder %v231, 0.0
    %vm238 = vcmp.ge.f32.partialorder %v234, 0.0
    %v239 = vstv %s115
    %v240 = vmul.f32 %v239, %v231
    %v241 = vmul.f32 %v239, %v234
    %v242 = vsel %vm237, %v231, %v240
    %v243 = vsel %vm238, %v234, %v241
    %v244 = vpack.c.bf16 %v243, %v242
    %v245 = vld [vmem:[#allocation9] sm:$0xf]
    %v246 = vld [vmem:[#allocation9 + $0x4] sm:$0xf]
    %v247 = vld [vmem:[#allocation9 + $0x8] sm:$0xf]
    %v248 = vld [vmem:[#allocation9 + $0xc] sm:$0xf]
    %v249 = vld [vmem:[#allocation9 + $0x10] sm:$0xf]
    %v250 = vld [vmem:[#allocation9 + $0x14] sm:$0xf]
    %v251 = vld [vmem:[#allocation9 + $0x18] sm:$0xf]
    %v252 = vld [vmem:[#allocation9 + $0x1c] sm:$0xf]
    %v253 = vld [vmem:[#allocation9 + $0x20] sm:$0xf]
    %v254 = vld [vmem:[#allocation9 + $0x24] sm:$0xf]
    %v255 = vld [vmem:[#allocation9 + $0x28] sm:$0xf]
    %v256 = vld [vmem:[#allocation9 + $0x2c] sm:$0xf]
    %v257 = vld [vmem:[#allocation9 + $0x30] sm:$0xf]
    %v258 = vld [vmem:[#allocation9 + $0x34] sm:$0xf]
    %v259 = vld [vmem:[#allocation9 + $0x38] sm:$0xf]
    %v260 = vld [vmem:[#allocation9 + $0x3c] sm:$0xf]
    %v261 = vld [vmem:[%s5] sm:$0x1]
    %v263 = vlaneseq
    %v264 = vshrl.u32 %v263, 7
    %v265 = vsub.s32 0, %v264
    %v266 = vrot.slane %v261, %v265
    %v284 = vunpack.c.l.b16 %v245
    %v285 = vunpack.c.l.b16 %v246
    %v286 = vunpack.c.l.b16 %v247
    %v287 = vunpack.c.l.b16 %v248
    %v288 = vunpack.c.l.b16 %v249
    %v289 = vunpack.c.l.b16 %v250
    %v290 = vunpack.c.l.b16 %v251
    %v291 = vunpack.c.l.b16 %v252
    %v292 = vunpack.c.l.b16 %v253
    %v293 = vunpack.c.l.b16 %v254
    %v294 = vunpack.c.l.b16 %v255
    %v295 = vunpack.c.l.b16 %v256
    %v296 = vunpack.c.l.b16 %v257
    %v297 = vunpack.c.l.b16 %v258
    %v298 = vunpack.c.l.b16 %v259
    %v299 = vunpack.c.l.b16 %v260
    %v300 = vpack.c.b16 %v285, %v284
    %v301 = vpack.c.b16 %v287, %v286
    %v302 = vpack.c.b16 %v289, %v288
    %v303 = vpack.c.b16 %v291, %v290
    %v304 = vpack.c.b16 %v293, %v292
    %v305 = vpack.c.b16 %v295, %v294
    %v306 = vpack.c.b16 %v297, %v296
    %v307 = vpack.c.b16 %v299, %v298
    %316 = vmatprep.subr.bf16.mxu0 0
    %317 = vmatpush1.bf16.msra.mxu0 %v307
    %318 = vmatprep.subr.bf16.mxu0 0
    %319 = vmatpush1.bf16.msra.mxu0 %v306
    %320 = vmatprep.subr.bf16.mxu0 0
    %321 = vmatpush1.bf16.msra.mxu0 %v305
    %322 = vmatprep.subr.bf16.mxu0 0
    %323 = vmatpush1.bf16.msra.mxu0 %v304
    %324 = vmatprep.subr.bf16.mxu0 0
    %325 = vmatpush1.bf16.msra.mxu0 %v303
    %326 = vmatprep.subr.bf16.mxu0 0
    %327 = vmatpush1.bf16.msra.mxu0 %v302
    %328 = vmatprep.subr.bf16.mxu0 0
    %329 = vmatpush1.bf16.msra.mxu0 %v301
    %330 = vmatprep.subr.bf16.mxu0 0
    %331 = vmatpush1.bf16.msra.mxu0 %v300
    %332 = vmatprep.subr.bf16.mxu0 0
    %333 = vmatpush2.bf16.msra.mxu0 0
    %334 = vmatprep.subr.bf16.mxu0 0
    %335 = vmatpush2.bf16.msra.mxu0 0
    %336 = vmatprep.subr.bf16.mxu0 0
    %337 = vmatpush2.bf16.msra.mxu0 0
    %338 = vmatprep.subr.bf16.mxu0 0
    %339 = vmatpush2.bf16.msra.mxu0 0
    %340 = vmatprep.subr.bf16.mxu0 0
    %341 = vmatpush2.bf16.msra.mxu0 0
    %342 = vmatprep.subr.bf16.mxu0 0
    %343 = vmatpush2.bf16.msra.mxu0 0
    %344 = vmatprep.subr.bf16.mxu0 0
    %345 = vmatpush2.bf16.msra.mxu0 0
    %346 = vmatprep.subr.bf16.mxu0 0
    %347 = vmatpush2.bf16.msra.mxu0 0
    %348 = vmatprep.mubr.bf16.mxu0 0
    %349 = vmatmul.mubr.bf16.gmra.mxu0 %v244
    %v350 = vpop.f32.mrf.mxu0
    %v351 = vadd.f32 %v266, %v350
    %v352 = vpop.f32.mrf.mxu0
    %v353 = vpop.f32.mrf.mxu0
    %v354 = vadd.f32 %v266, %v353
    %v355 = vpop.f32.mrf.mxu0
    %356 = vdwg.mxu0
    %vm357 = vcmp.ge.f32.partialorder %v351, 0.0
    %vm358 = vcmp.ge.f32.partialorder %v354, 0.0
    %v359 = vstv %s116
    %v360 = vmul.f32 %v359, %v351
    %v361 = vmul.f32 %v359, %v354
    %v362 = vsel %vm357, %v351, %v360
    %v363 = vsel %vm358, %v354, %v361
    %v364 = vpack.c.bf16 %v363, %v362
    %v365 = vld [vmem:[#allocation11] sm:$0xf]
    %v366 = vld [vmem:[#allocation11 + $0x4] sm:$0xf]
    %v367 = vld [vmem:[#allocation11 + $0x8] sm:$0xf]
    %v368 = vld [vmem:[#allocation11 + $0xc] sm:$0xf]
    %v369 = vld [vmem:[#allocation11 + $0x10] sm:$0xf]
    %v370 = vld [vmem:[#allocation11 + $0x14] sm:$0xf]
    %v371 = vld [vmem:[#allocation11 + $0x18] sm:$0xf]
    %v372 = vld [vmem:[#allocation11 + $0x1c] sm:$0xf]
    %v373 = vld [vmem:[#allocation11 + $0x20] sm:$0xf]
    %v374 = vld [vmem:[#allocation11 + $0x24] sm:$0xf]
    %v375 = vld [vmem:[#allocation11 + $0x28] sm:$0xf]
    %v376 = vld [vmem:[#allocation11 + $0x2c] sm:$0xf]
    %v377 = vld [vmem:[#allocation11 + $0x30] sm:$0xf]
    %v378 = vld [vmem:[#allocation11 + $0x34] sm:$0xf]
    %v379 = vld [vmem:[#allocation11 + $0x38] sm:$0xf]
    %v380 = vld [vmem:[#allocation11 + $0x3c] sm:$0xf]
    %v381 = vld [vmem:[%s7] sm:$0x1]
    %v383 = vlaneseq
    %v384 = vshrl.u32 %v383, 7
    %v385 = vsub.s32 0, %v384
    %v386 = vrot.slane %v381, %v385
    %v404 = vunpack.c.l.b16 %v365
    %v405 = vunpack.c.l.b16 %v366
    %v406 = vunpack.c.l.b16 %v367
    %v407 = vunpack.c.l.b16 %v368
    %v408 = vunpack.c.l.b16 %v369
    %v409 = vunpack.c.l.b16 %v370
    %v410 = vunpack.c.l.b16 %v371
    %v411 = vunpack.c.l.b16 %v372
    %v412 = vunpack.c.l.b16 %v373
    %v413 = vunpack.c.l.b16 %v374
    %v414 = vunpack.c.l.b16 %v375
    %v415 = vunpack.c.l.b16 %v376
    %v416 = vunpack.c.l.b16 %v377
    %v417 = vunpack.c.l.b16 %v378
    %v418 = vunpack.c.l.b16 %v379
    %v419 = vunpack.c.l.b16 %v380
    %v420 = vpack.c.b16 %v405, %v404
    %v421 = vpack.c.b16 %v407, %v406
    %v422 = vpack.c.b16 %v409, %v408
    %v423 = vpack.c.b16 %v411, %v410
    %v424 = vpack.c.b16 %v413, %v412
    %v425 = vpack.c.b16 %v415, %v414
    %v426 = vpack.c.b16 %v417, %v416
    %v427 = vpack.c.b16 %v419, %v418
    %436 = vmatprep.subr.bf16.mxu0 0
    %437 = vmatpush1.bf16.msra.mxu0 %v427
    %438 = vmatprep.subr.bf16.mxu0 0
    %439 = vmatpush1.bf16.msra.mxu0 %v426
    %440 = vmatprep.subr.bf16.mxu0 0
    %441 = vmatpush1.bf16.msra.mxu0 %v425
    %442 = vmatprep.subr.bf16.mxu0 0
    %443 = vmatpush1.bf16.msra.mxu0 %v424
    %444 = vmatprep.subr.bf16.mxu0 0
    %445 = vmatpush1.bf16.msra.mxu0 %v423
    %446 = vmatprep.subr.bf16.mxu0 0
    %447 = vmatpush1.bf16.msra.mxu0 %v422
    %448 = vmatprep.subr.bf16.mxu0 0
    %449 = vmatpush1.bf16.msra.mxu0 %v421
    %450 = vmatprep.subr.bf16.mxu0 0
    %451 = vmatpush1.bf16.msra.mxu0 %v420
    %452 = vmatprep.subr.bf16.mxu0 0
    %453 = vmatpush2.bf16.msra.mxu0 0
    %454 = vmatprep.subr.bf16.mxu0 0
    %455 = vmatpush2.bf16.msra.mxu0 0
    %456 = vmatprep.subr.bf16.mxu0 0
    %457 = vmatpush2.bf16.msra.mxu0 0
    %458 = vmatprep.subr.bf16.mxu0 0
    %459 = vmatpush2.bf16.msra.mxu0 0
    %460 = vmatprep.subr.bf16.mxu0 0
    %461 = vmatpush2.bf16.msra.mxu0 0
    %462 = vmatprep.subr.bf16.mxu0 0
    %463 = vmatpush2.bf16.msra.mxu0 0
    %464 = vmatprep.subr.bf16.mxu0 0
    %465 = vmatpush2.bf16.msra.mxu0 0
    %466 = vmatprep.subr.bf16.mxu0 0
    %467 = vmatpush2.bf16.msra.mxu0 0
    %468 = vmatprep.mubr.bf16.mxu0 0
    %469 = vmatmul.mubr.bf16.gmra.mxu0 %v364
    %v470 = vpop.f32.mrf.mxu0
    %v471 = vadd.f32 %v386, %v470
    %v472 = vpop.f32.mrf.mxu0
    %v473 = vpop.f32.mrf.mxu0
    %v474 = vadd.f32 %v386, %v473
    %v475 = vpop.f32.mrf.mxu0
    %476 = vdwg.mxu0
    %v477 = vmax.f32 %v471, 0.0
    %v478 = vmax.f32 %v474, 0.0
    %vm479 = vcmp.ne.f32.partialorder %v471, %v471
    %vm480 = vcmp.ne.f32.partialorder %v474, %v474
    %v481 = vadd.f32 %v471, 0.0
    %v482 = vadd.f32 %v474, 0.0
    %v483 = vand.u32 2147483647, %v471
    %v484 = vand.u32 2147483647, %v474
    %v485 = vsub.f32 0.0, %v483
    %v486 = vsub.f32 0.0, %v484
    %v487 = vmul.f32 %v485, 1.442695
    %v488 = vpow.pop %v487
    %v489 = vmul.f32 %v486, 1.442695
    %v490 = vpow.pop %v489
    %v491 = vadd.f32 %v488, 1.0
    %v492 = vlog2.pop %v491
    %v493 = vmul.f32 %v492, 0.6931472
    %v494 = vmul.f32 -0.5, %v488
    %v495 = vadd.f32 %v494, 1.0
    %v496 = vmul.f32 %v495, %v488
    %v497 = vand.u32 2147483647, %v488
    %vm498 = vcmp.lt.f32.partialorder %v497, 0.0004427343
    %v499 = vsel %vm498, %v496, %v493
    %v500 = vadd.f32 %v490, 1.0
    %v501 = vlog2.pop %v500
    %v502 = vmul.f32 %v501, 0.6931472
    %v503 = vmul.f32 -0.5, %v490
    %v504 = vadd.f32 %v503, 1.0
    %v505 = vmul.f32 %v504, %v490
    %v506 = vand.u32 2147483647, %v490
    %vm507 = vcmp.lt.f32.partialorder %v506, 0.0004427343
    %v508 = vsel %vm507, %v505, %v502
    %v509 = vadd.f32 %v477, %v499
    %v510 = vadd.f32 %v478, %v508
    %v511 = vsel %vm479, %v481, %v509
    %v512 = vsel %vm480, %v482, %v510
    %v513 = vld [vmem:[#allocation6] sm:$0xff]
    %v514 = vld [vmem:[#allocation6 + $0x8] sm:$0xff]
    %v515 = vmul.f32 %v513, %v511
    %v516 = vmul.f32 %v514, %v512
    %v517 = vadd.f32 %v362, %v515
    %v518 = vadd.f32 %v363, %v516
    %519 = vst [vmem:[#allocation13] sm:$0xff] %v517
    %520 = vst [vmem:[#allocation13 + $0x8] sm:$0xff] %v518
    // Predicated region
    $region62: #{tpu_custom_call.1} parent=1 // pred_check
      _
    $region63: #{tpu_custom_call.1} parent=1 // pred_check_branch
      %522 = sbr.rel (0) target = $region65
    $region64: #{tpu_custom_call.1} parent=1 // pred_region
      %s524 = ssub.s32 256, 256
      %525 = vsyncadd [#allocation4], %s524
      %s526 = sshll.u32 [#allocation13], 4
      %s527 = int_to_ptr.vmem [resolvable:$true] %s526
      %532 = dma.vmem_to_hbm [thread:$0]  %s527, 256, %s9, [#allocation4], 128, 128, 8
    $region65: #{tpu_custom_call.1} parent=1 // pred_fallthru
      _
    // Predicated region
    $region66: #{tpu_custom_call.1} parent=1 // pred_check
      _
    $region67: #{tpu_custom_call.1} parent=1 // pred_check_branch
      %534 = sbr.rel (0) target = $region69
    $region68: #{tpu_custom_call.1} parent=1 // pred_region
      %535 = dma.done [#allocation4], 256
    $region69: #{tpu_custom_call.1} parent=1 // pred_fallthru
      _
    %536 = vsyncpa [#allocation3], 1
    %537 = vsyncpa [#allocation7], 1
    %538 = vsyncpa [#allocation10], 1
    %539 = vsyncpa [#allocation4], 1
    %540 = vsyncpa [#allocation5], 1

</llo_original>
